<compile_context>
chip_gen: v6e
topology: v6e:2x2x1
jax: 0.10.0
libtpu: 0.0.40
codegen_flags: <defaults>
</compile_context>

<pallas_src>
import jax
import jax.numpy as jnp
from jax.experimental import pallas as pl
from jax.experimental.pallas import tpu as pltpu


HIDDEN = 32            # hidden width of the synthetic "model" MLP
OUT_DIM = 7            # 3 (d_xyz) + 4 (d_rot)
TL_MAX = 32768         # max points per tile (lanes); multiple of 128
USE_BF16_MATMUL = True # bf16 MXU operands with f32 accumulation (set False for exact f32)
_MM_DTYPE = jnp.bfloat16 if USE_BF16_MATMUL else jnp.float32


def _cdiv(a, b):
    return -(-a // b)


def _round_up(x, m):
    return _cdiv(x, m) * m


def _mem_kernel(x_ref, bmin_ref, rng_ref, def_ref, w1t_ref, b1_ref,
                w2t_ref, b2_ref, dxyz_ref, drot_ref, mask_ref):
    # x_ref: (3, TL) points-on-lanes.  Outputs: (3, TL), (4, TL), (1, TL).
    x = x_ref[...]                                          # (3, TL) f32
    contracted = (x - bmin_ref[...]) / rng_ref[...]         # (3, TL) f32

    # mask = all(0 <= c <= 1) over the 3 feature rows.  Slice the f32 rows and
    # combine with same-shape logical ANDs (no cross-lane reduce, no bool
    # sublane relayout).
    c0 = contracted[0:1, :]
    c1 = contracted[1:2, :]
    c2 = contracted[2:3, :]
    mask = jnp.logical_and(
        jnp.logical_and(jnp.logical_and(c0 >= 0.0, c0 <= 1.0),
                        jnp.logical_and(c1 >= 0.0, c1 <= 1.0)),
        jnp.logical_and(c2 >= 0.0, c2 <= 1.0))              # (1, TL) bool

    # model(contracted): dense 2-layer ReLU MLP, lane-dense, bf16 operands with
    # f32 accumulation on the MXU.
    h = jnp.dot(w1t_ref[...], contracted.astype(_MM_DTYPE),
                preferred_element_type=jnp.float32) + b1_ref[...]   # (H, TL) f32
    h = jnp.maximum(h, 0.0)
    resi = jnp.dot(w2t_ref[...], h.astype(_MM_DTYPE),
                   preferred_element_type=jnp.float32) + b2_ref[...]  # (7, TL) f32

    # One fused select against the default column [0, 0, 0, 1, 0, 0, 0].
    resi_sel = jnp.where(mask, resi, def_ref[...])          # (7, TL)
    dxyz_ref[...] = resi_sel[0:3, :]                        # d_xyz rows
    drot_ref[...] = resi_sel[3:7, :]                        # d_rot rows
    mask_ref[...] = mask.astype(jnp.float32)                # mask row


def _choose_tiling(n):
    """Tile width (lanes) and grid length for N points."""
    n128 = _round_up(max(n, 1), 128)
    if n128 >= 256:
        # At least 2 grid steps when there is enough work (v7x has 2 TCs and
        # ("parallel",) shards the grid across them), capped at TL_MAX lanes,
        # split as evenly as possible (no up-to-2x pad blowup).
        num_tiles = max(2, _cdiv(n128, TL_MAX))
    else:
        num_tiles = 1
    tl = _round_up(_cdiv(n128, num_tiles), 128)
    grid = _cdiv(max(n, 1), tl)
    return tl, grid


def _forward_fm(xyz_t, xyz_bound_min, xyz_bound_max, w1, b1, w2, b2):
    """Feature-major core: xyz_t (3, N) -> (mask (N,), d_xyz_t (3, N), d_rot_t (4, N))."""
    n = xyz_t.shape[1]
    tl, grid = _choose_tiling(n)

    xyz_t = xyz_t.astype(jnp.float32)
    bmin = xyz_bound_min.reshape(3, 1).astype(jnp.float32)
    rng = (xyz_bound_max.reshape(3, 1).astype(jnp.float32) - bmin)   # bmax - bmin
    defaults = jnp.array([0.0, 0.0, 0.0, 1.0, 0.0, 0.0, 0.0],
                         dtype=jnp.float32).reshape(OUT_DIM, 1)

    w1t = w1.T.astype(_MM_DTYPE)                    # (H, 3)
    w2t = w2.T.astype(_MM_DTYPE)                    # (7, H)
    b1c = b1.reshape(HIDDEN, 1).astype(jnp.float32)
    b2c = b2.reshape(OUT_DIM, 1).astype(jnp.float32)

    col_spec = lambda rows: pl.BlockSpec((rows, tl), lambda i: (0, i))
    full_spec = lambda shp: pl.BlockSpec(shp, lambda i: (0, 0))

    d_xyz_t, d_rot_t, mask_f = pl.pallas_call(
        _mem_kernel,
        out_shape=(
            jax.ShapeDtypeStruct((3, n), jnp.float32),        # d_xyz (feature-major)
            jax.ShapeDtypeStruct((4, n), jnp.float32),        # d_rot (feature-major)
            jax.ShapeDtypeStruct((1, n), jnp.float32),        # mask row
        ),
        grid_spec=pltpu.PrefetchScalarGridSpec(
            num_scalar_prefetch=0,
            grid=(grid,),
            in_specs=[
                col_spec(3),                       # xyz_t tile (points on lanes)
                full_spec((3, 1)),                 # bound_min
                full_spec((3, 1)),                 # bound_max - bound_min
                full_spec((OUT_DIM, 1)),           # default column [0,0,0,1,0,0,0]
                full_spec((HIDDEN, 3)),            # W1^T
                full_spec((HIDDEN, 1)),            # b1
                full_spec((OUT_DIM, HIDDEN)),      # W2^T
                full_spec((OUT_DIM, 1)),           # b2
            ],
            out_specs=(col_spec(3), col_spec(4), col_spec(1)),
        ),
        compiler_params=pltpu.CompilerParams(
            dimension_semantics=("parallel",),
            vmem_limit_bytes=48 * 1024 * 1024,
        ),
        cost_estimate=pl.CostEstimate(
            flops=2 * (3 * HIDDEN + HIDDEN * OUT_DIM) * n,
            transcendentals=3 * n,
            bytes_accessed=(3 + 3 + 4 + 1) * 4 * n,
        ),
    )(xyz_t, bmin, rng, defaults, w1t, b1c, w2t, b2c)

    mask = mask_f[0] > 0.5
    return mask, d_xyz_t, d_rot_t


@jax.jit
def motion_estimation_forward_fm(xyz_t, xyz_bound_min, xyz_bound_max, w1, b1, w2, b2):
    """Feature-major fast path: xyz_t (3, N) in, (mask, d_xyz (3,N), d_rot (4,N)) out.

    No layout passes over HBM besides the kernel's own I/O; use this entry point
    when the caller can keep points feature-major.
    """
    return _forward_fm(xyz_t, xyz_bound_min, xyz_bound_max, w1, b1, w2, b2)


@jax.jit
def motion_estimation_forward(xyz, xyz_bound_min, xyz_bound_max, w1, b1, w2, b2):
    """PyTorch-compatible interface: xyz (N, 3) -> (mask (N,), d_xyz (N, 3), d_rot (N, 4)).

    The in/out transposes here are pure layout plumbing; prefer
    motion_estimation_forward_fm to avoid them entirely.
    """
    mask, d_xyz_t, d_rot_t = _forward_fm(
        xyz.T, xyz_bound_min, xyz_bound_max, w1, b1, w2, b2)
    return mask, d_xyz_t.T, d_rot_t.T


def _reference(xyz, bmin, bmax, w1, b1, w2, b2, mm_dtype=jnp.float32):
    """Plain-JAX reference of the PyTorch semantics (matmul dtype selectable)."""
    c = (xyz - bmin) / (bmax - bmin)
    mask = jnp.all((c >= 0) & (c <= 1), axis=1)
    h = jnp.maximum(
        jnp.dot(c.astype(mm_dtype), w1.astype(mm_dtype),
                preferred_element_type=jnp.float32) + b1, 0.0)
    resi = jnp.dot(h.astype(mm_dtype), w2.astype(mm_dtype),
                   preferred_element_type=jnp.float32) + b2
    d_xyz = jnp.where(mask[:, None], resi[:, :3], 0.0)
    rot_default = jnp.zeros((xyz.shape[0], 4), jnp.float32).at[:, 0].set(1.0)
    d_rot = jnp.where(mask[:, None], resi[:, 3:7], rot_default)
    return mask, d_xyz, d_rot


if __name__ == "__main__":
    key = jax.random.PRNGKey(0)
    k_xyz, k_w1, k_w2 = jax.random.split(key, 3)

    N = 200  # number of gaussians / points
    # Points sampled wider than the bounds so the mask is non-trivial.
    xyz = jax.random.normal(k_xyz, (N, 3), dtype=jnp.float32) * 1.2
    xyz_bound_min = jnp.array([-1.0, -1.0, -1.0], dtype=jnp.float32)
    xyz_bound_max = jnp.array([1.0, 1.0, 1.0], dtype=jnp.float32)

    # TODO(synk): the original `self.model` is an arbitrary external network; a
    # representative 2-layer ReLU MLP (3 -> 32 -> 7) stands in for it here.
    w1 = jax.random.normal(k_w1, (3, HIDDEN), dtype=jnp.float32) * 0.3
    b1 = jnp.zeros((HIDDEN,), dtype=jnp.float32)
    w2 = jax.random.normal(k_w2, (HIDDEN, OUT_DIM), dtype=jnp.float32) * 0.1
    b2 = jnp.zeros((OUT_DIM,), dtype=jnp.float32)

    # PyTorch-compatible (N, 3) interface.
    mask, d_xyz, d_rot = motion_estimation_forward(
        xyz, xyz_bound_min, xyz_bound_max, w1, b1, w2, b2)
    jax.block_until_ready((mask, d_xyz, d_rot))

    # Feature-major fast path (no wrapper layout passes).
    mask_fm, d_xyz_t, d_rot_t = motion_estimation_forward_fm(
        xyz.T, xyz_bound_min, xyz_bound_max, w1, b1, w2, b2)
    jax.block_until_ready((mask_fm, d_xyz_t, d_rot_t))

    # Tight check against a reference that mirrors the kernel's matmul dtype.
    mask_r, d_xyz_r, d_rot_r = _reference(
        xyz, xyz_bound_min, xyz_bound_max, w1, b1, w2, b2, mm_dtype=_MM_DTYPE)
    assert bool(jnp.all(mask == mask_r))
    assert bool(jnp.all(mask_fm == mask_r))
    assert float(jnp.max(jnp.abs(d_xyz - d_xyz_r))) < 5e-3
    assert float(jnp.max(jnp.abs(d_rot - d_rot_r))) < 5e-3
    assert float(jnp.max(jnp.abs(d_xyz_t.T - d_xyz_r))) < 5e-3
    assert float(jnp.max(jnp.abs(d_rot_t.T - d_rot_r))) < 5e-3

    # Loose check against the exact f32 PyTorch semantics (covers bf16 matmul).
    mask_f32, d_xyz_f32, d_rot_f32 = _reference(
        xyz, xyz_bound_min, xyz_bound_max, w1, b1, w2, b2, mm_dtype=jnp.float32)
    assert bool(jnp.all(mask == mask_f32))
    assert float(jnp.max(jnp.abs(d_xyz - d_xyz_f32))) < 5e-2
    assert float(jnp.max(jnp.abs(d_rot - d_rot_f32))) < 5e-2

    print("KERNEL_OK")
</pallas_src>

<mosaic_0001>
module attributes {stable_mosaic.version = 11 : i64} {
  func.func @_mem_kernel(%arg0: i32, %arg1: memref<3x128xf32, #tpu.memory_space<vmem>>, %arg2: memref<3x1xf32, #tpu.memory_space<vmem>>, %arg3: memref<3x1xf32, #tpu.memory_space<vmem>>, %arg4: memref<7x1xf32, #tpu.memory_space<vmem>>, %arg5: memref<32x3xbf16, #tpu.memory_space<vmem>>, %arg6: memref<32x1xf32, #tpu.memory_space<vmem>>, %arg7: memref<7x32xbf16, #tpu.memory_space<vmem>>, %arg8: memref<7x1xf32, #tpu.memory_space<vmem>>, %arg9: memref<3x128xf32, #tpu.memory_space<vmem>>, %arg10: memref<4x128xf32, #tpu.memory_space<vmem>>, %arg11: memref<1x128xf32, #tpu.memory_space<vmem>>) attributes {dimension_semantics = [#tpu.dimension_semantics<parallel>], iteration_bounds = array<i64: 2>, scalar_prefetch = 0 : i64, scratch_operands = 0 : i64, tpu.core_type = #tpu.core_type<tc>, window_params = [{transform_indices = @transform_0, window_bounds = array<i64: 3, 128>}, {pipeline_mode = #tpu.pipeline_mode<synchronous>, transform_indices = @transform_1, window_bounds = array<i64: 3, 1>}, {pipeline_mode = #tpu.pipeline_mode<synchronous>, transform_indices = @transform_2, window_bounds = array<i64: 3, 1>}, {pipeline_mode = #tpu.pipeline_mode<synchronous>, transform_indices = @transform_3, window_bounds = array<i64: 7, 1>}, {pipeline_mode = #tpu.pipeline_mode<synchronous>, transform_indices = @transform_4, window_bounds = array<i64: 32, 3>}, {pipeline_mode = #tpu.pipeline_mode<synchronous>, transform_indices = @transform_5, window_bounds = array<i64: 32, 1>}, {pipeline_mode = #tpu.pipeline_mode<synchronous>, transform_indices = @transform_6, window_bounds = array<i64: 7, 32>}, {pipeline_mode = #tpu.pipeline_mode<synchronous>, transform_indices = @transform_7, window_bounds = array<i64: 7, 1>}, {transform_indices = @transform_8, window_bounds = array<i64: 3, 128>}, {transform_indices = @transform_9, window_bounds = array<i64: 4, 128>}, {transform_indices = @transform_10, window_bounds = array<i64: 1, 128>}]} {
    %c0 = arith.constant 0 : index
    %c0_0 = arith.constant 0 : index
    %0 = vector.load %arg1[%c0, %c0_0] : memref<3x128xf32, #tpu.memory_space<vmem>>, vector<3x128xf32>
    %c0_1 = arith.constant 0 : index
    %c0_2 = arith.constant 0 : index
    %1 = vector.load %arg2[%c0_1, %c0_2] : memref<3x1xf32, #tpu.memory_space<vmem>>, vector<3x1xf32>
    %2 = vector.broadcast %1 : vector<3x1xf32> to vector<3x128xf32>
    %3 = arith.subf %0, %2 : vector<3x128xf32>
    %c0_3 = arith.constant 0 : index
    %c0_4 = arith.constant 0 : index
    %4 = vector.load %arg3[%c0_3, %c0_4] : memref<3x1xf32, #tpu.memory_space<vmem>>, vector<3x1xf32>
    %5 = vector.broadcast %4 : vector<3x1xf32> to vector<3x128xf32>
    %6 = arith.divf %3, %5 : vector<3x128xf32>
    %7 = vector.extract_strided_slice %6 {offsets = [0, 0], sizes = [1, 128], strides = [1, 1]} : vector<3x128xf32> to vector<1x128xf32>
    %8 = vector.extract_strided_slice %6 {offsets = [1, 0], sizes = [1, 128], strides = [1, 1]} : vector<3x128xf32> to vector<1x128xf32>
    %9 = vector.extract_strided_slice %6 {offsets = [2, 0], sizes = [1, 128], strides = [1, 1]} : vector<3x128xf32> to vector<1x128xf32>
    %cst = arith.constant 0.000000e+00 : f32
    %10 = vector.broadcast %cst : f32 to vector<1x128xf32>
    %11 = arith.cmpf oge, %7, %10 : vector<1x128xf32>
    %cst_5 = arith.constant 1.000000e+00 : f32
    %12 = vector.broadcast %cst_5 : f32 to vector<1x128xf32>
    %13 = arith.cmpf ole, %7, %12 : vector<1x128xf32>
    %14 = arith.andi %11, %13 : vector<1x128xi1>
    %cst_6 = arith.constant 0.000000e+00 : f32
    %15 = vector.broadcast %cst_6 : f32 to vector<1x128xf32>
    %16 = arith.cmpf oge, %8, %15 : vector<1x128xf32>
    %cst_7 = arith.constant 1.000000e+00 : f32
    %17 = vector.broadcast %cst_7 : f32 to vector<1x128xf32>
    %18 = arith.cmpf ole, %8, %17 : vector<1x128xf32>
    %19 = arith.andi %16, %18 : vector<1x128xi1>
    %20 = arith.andi %14, %19 : vector<1x128xi1>
    %cst_8 = arith.constant 0.000000e+00 : f32
    %21 = vector.broadcast %cst_8 : f32 to vector<1x128xf32>
    %22 = arith.cmpf oge, %9, %21 : vector<1x128xf32>
    %cst_9 = arith.constant 1.000000e+00 : f32
    %23 = vector.broadcast %cst_9 : f32 to vector<1x128xf32>
    %24 = arith.cmpf ole, %9, %23 : vector<1x128xf32>
    %25 = arith.andi %22, %24 : vector<1x128xi1>
    %26 = arith.andi %20, %25 : vector<1x128xi1>
    %c0_10 = arith.constant 0 : index
    %c0_11 = arith.constant 0 : index
    %27 = vector.load %arg5[%c0_10, %c0_11] : memref<32x3xbf16, #tpu.memory_space<vmem>>, vector<32x3xbf16>
    %28 = arith.truncf %6 : vector<3x128xf32> to vector<3x128xbf16>
    %cst_12 = arith.constant dense<0.000000e+00> : vector<32x128xf32>
    %29 = tpu.matmul %27, %28, %cst_12 {dimension_numbers = #tpu.dot_dimension_numbers<[1], [0], [0], [1], [0, 0, 1, 1], [], []>} : vector<32x3xbf16>, vector<3x128xbf16>, vector<32x128xf32> -> vector<32x128xf32>
    %c0_13 = arith.constant 0 : index
    %c0_14 = arith.constant 0 : index
    %30 = vector.load %arg6[%c0_13, %c0_14] : memref<32x1xf32, #tpu.memory_space<vmem>>, vector<32x1xf32>
    %31 = vector.broadcast %30 : vector<32x1xf32> to vector<32x128xf32>
    %32 = arith.addf %29, %31 : vector<32x128xf32>
    %cst_15 = arith.constant 0.000000e+00 : f32
    %33 = vector.broadcast %cst_15 : f32 to vector<32x128xf32>
    %34 = arith.maximumf %32, %33 : vector<32x128xf32>
    %c0_16 = arith.constant 0 : index
    %c0_17 = arith.constant 0 : index
    %35 = vector.load %arg7[%c0_16, %c0_17] : memref<7x32xbf16, #tpu.memory_space<vmem>>, vector<7x32xbf16>
    %36 = arith.truncf %34 : vector<32x128xf32> to vector<32x128xbf16>
    %cst_18 = arith.constant dense<0.000000e+00> : vector<7x128xf32>
    %37 = tpu.matmul %35, %36, %cst_18 {dimension_numbers = #tpu.dot_dimension_numbers<[1], [0], [0], [1], [0, 0, 1, 1], [], []>} : vector<7x32xbf16>, vector<32x128xbf16>, vector<7x128xf32> -> vector<7x128xf32>
    %c0_19 = arith.constant 0 : index
    %c0_20 = arith.constant 0 : index
    %38 = vector.load %arg8[%c0_19, %c0_20] : memref<7x1xf32, #tpu.memory_space<vmem>>, vector<7x1xf32>
    %39 = vector.broadcast %38 : vector<7x1xf32> to vector<7x128xf32>
    %40 = arith.addf %37, %39 : vector<7x128xf32>
    %c0_21 = arith.constant 0 : index
    %c0_22 = arith.constant 0 : index
    %41 = vector.load %arg4[%c0_21, %c0_22] : memref<7x1xf32, #tpu.memory_space<vmem>>, vector<7x1xf32>
    %42 = vector.shape_cast %26 : vector<1x128xi1> to vector<1x128xi1>
    %43 = vector.broadcast %42 : vector<1x128xi1> to vector<7x128xi1>
    %44 = vector.shape_cast %41 : vector<7x1xf32> to vector<7x1xf32>
    %45 = vector.broadcast %44 : vector<7x1xf32> to vector<7x128xf32>
    %46 = arith.select %43, %40, %45 : vector<7x128xi1>, vector<7x128xf32>
    %47 = vector.extract_strided_slice %46 {offsets = [0, 0], sizes = [3, 128], strides = [1, 1]} : vector<7x128xf32> to vector<3x128xf32>
    %c0_23 = arith.constant 0 : index
    %c0_24 = arith.constant 0 : index
    %48 = vector.load %arg9[%c0_23, %c0_24] : memref<3x128xf32, #tpu.memory_space<vmem>>, vector<3x128xf32>
    tpu.vector_store %arg9[%c0_23, %c0_24], %47 {strides = array<i32>} : memref<3x128xf32, #tpu.memory_space<vmem>>, vector<3x128xf32>,
    %49 = vector.extract_strided_slice %46 {offsets = [3, 0], sizes = [4, 128], strides = [1, 1]} : vector<7x128xf32> to vector<4x128xf32>
    %c0_25 = arith.constant 0 : index
    %c0_26 = arith.constant 0 : index
    %50 = vector.load %arg10[%c0_25, %c0_26] : memref<4x128xf32, #tpu.memory_space<vmem>>, vector<4x128xf32>
    tpu.vector_store %arg10[%c0_25, %c0_26], %49 {strides = array<i32>} : memref<4x128xf32, #tpu.memory_space<vmem>>, vector<4x128xf32>,
    %51 = arith.extui %26 : vector<1x128xi1> to vector<1x128xi32>
    %52 = arith.sitofp %51 : vector<1x128xi32> to vector<1x128xf32>
    %c0_27 = arith.constant 0 : index
    %c0_28 = arith.constant 0 : index
    %53 = vector.load %arg11[%c0_27, %c0_28] : memref<1x128xf32, #tpu.memory_space<vmem>>, vector<1x128xf32>
    tpu.vector_store %arg11[%c0_27, %c0_28], %52 {strides = array<i32>} : memref<1x128xf32, #tpu.memory_space<vmem>>, vector<1x128xf32>,
    return
  }
  func.func @transform_0(%arg0: i32) -> (i32, i32) {
    %c0_i32 = arith.constant 0 : i32
    %c0_i32_0 = arith.constant 0 : i32
    return %c0_i32, %arg0 : i32, i32
  }
  func.func @transform_1(%arg0: i32) -> (i32, i32) {
    %c0_i32 = arith.constant 0 : i32
    %c0_i32_0 = arith.constant 0 : i32
    %c0_i32_1 = arith.constant 0 : i32
    return %c0_i32, %c0_i32_0 : i32, i32
  }
  func.func @transform_2(%arg0: i32) -> (i32, i32) {
    %c0_i32 = arith.constant 0 : i32
    %c0_i32_0 = arith.constant 0 : i32
    %c0_i32_1 = arith.constant 0 : i32
    return %c0_i32, %c0_i32_0 : i32, i32
  }
  func.func @transform_3(%arg0: i32) -> (i32, i32) {
    %c0_i32 = arith.constant 0 : i32
    %c0_i32_0 = arith.constant 0 : i32
    %c0_i32_1 = arith.constant 0 : i32
    return %c0_i32, %c0_i32_0 : i32, i32
  }
  func.func @transform_4(%arg0: i32) -> (i32, i32) {
    %c0_i32 = arith.constant 0 : i32
    %c0_i32_0 = arith.constant 0 : i32
    %c0_i32_1 = arith.constant 0 : i32
    return %c0_i32, %c0_i32_0 : i32, i32
  }
  func.func @transform_5(%arg0: i32) -> (i32, i32) {
    %c0_i32 = arith.constant 0 : i32
    %c0_i32_0 = arith.constant 0 : i32
    %c0_i32_1 = arith.constant 0 : i32
    return %c0_i32, %c0_i32_0 : i32, i32
  }
  func.func @transform_6(%arg0: i32) -> (i32, i32) {
    %c0_i32 = arith.constant 0 : i32
    %c0_i32_0 = arith.constant 0 : i32
    %c0_i32_1 = arith.constant 0 : i32
    return %c0_i32, %c0_i32_0 : i32, i32
  }
  func.func @transform_7(%arg0: i32) -> (i32, i32) {
    %c0_i32 = arith.constant 0 : i32
    %c0_i32_0 = arith.constant 0 : i32
    %c0_i32_1 = arith.constant 0 : i32
    return %c0_i32, %c0_i32_0 : i32, i32
  }
  func.func @transform_8(%arg0: i32) -> (i32, i32) {
    %c0_i32 = arith.constant 0 : i32
    %c0_i32_0 = arith.constant 0 : i32
    return %c0_i32, %arg0 : i32, i32
  }
  func.func @transform_9(%arg0: i32) -> (i32, i32) {
    %c0_i32 = arith.constant 0 : i32
    %c0_i32_0 = arith.constant 0 : i32
    return %c0_i32, %arg0 : i32, i32
  }
  func.func @transform_10(%arg0: i32) -> (i32, i32) {
    %c0_i32 = arith.constant 0 : i32
    %c0_i32_0 = arith.constant 0 : i32
    return %c0_i32, %arg0 : i32, i32
  }
}

</mosaic_0001>

<llo_original>
// kernel: motion_estimation_forward.1
$region0: #{motion_estimation_forward.1}
  #allocation0 [shape = 'u32[]', space=smem, size = 0x4, offset = 0x4, fixed_abs, tag = 'smem constant byte address 0x4 - core index']
  #allocation1 [shape = 'u32[144,128]{1,0:T(1,128)}', space=vmem, size = 0x12000, scoped, tag = 'internal scratch']
  %s0 = inlined_call_operand.vmem [shape: f32[3,200], index: 0, kind: input, shape index: {}]
  %s1 = inlined_call_operand.vmem [shape: f32[3,1], index: 1, kind: input, shape index: {}]
  %s2 = inlined_call_operand.vmem [shape: f32[3,1], index: 2, kind: input, shape index: {}]
  %s3 = inlined_call_operand.vmem [shape: f32[7,1], index: 3, kind: input, shape index: {}]
  %s4 = inlined_call_operand.vmem [shape: bf16[32,3], index: 4, kind: input, shape index: {}]
  %s5 = inlined_call_operand.vmem [shape: f32[32,1], index: 5, kind: input, shape index: {}]
  %s6 = inlined_call_operand.vmem [shape: bf16[7,32], index: 6, kind: input, shape index: {}]
  %s7 = inlined_call_operand.vmem [shape: f32[7,1], index: 7, kind: input, shape index: {}]
  %s8 = inlined_call_operand.hbm [shape: f32[3,200], index: 8, kind: output, shape index: {0}]
  %s9 = inlined_call_operand.hbm [shape: f32[4,200], index: 9, kind: output, shape index: {1}]
  %s10 = inlined_call_operand.vmem [shape: f32[1,200], index: 10, kind: output, shape index: {2}]
  %11 = xla_tuple %s8, %s9, %s10
  %s12 = sld [smem:[#allocation0]]
  $region81: #{motion_estimation_forward.1} parent=0
    _
  %s14 = ssub.s32 1, %s12
  %s15 = scalar_select 0, %s14, %s12
  $region1: #{motion_estimation_forward.1} parent=0
    #allocation2 [shape = 'u8[4096]{0}', space=vmem, size = 0x1000, scoped, tag = 'output window, operand 0']
    #allocation3 [shape = 's32[2]{0}', space=sflag, size = 0x8, scoped, tag = 'scoped memory for motion_estimation_forward.1']
    #allocation4 [shape = 'u8[4096]{0}', space=vmem, size = 0x1000, scoped, tag = 'output window, operand 1']
    #allocation5 [shape = 's32[2]{0}', space=sflag, size = 0x8, scoped, tag = 'scoped memory for motion_estimation_forward.1']
    %16 = vsyncpa [#allocation3], 0
    %s17 = scalar_lea.sflag [#allocation3], 1
    %18 = vsyncpa %s17, 0
    %19 = vsyncpa [#allocation5], 0
    %s20 = scalar_lea.sflag [#allocation5], 1
    %21 = vsyncpa %s20, 0
    loop: start=0, step=1, limit=4
    $region2: #{motion_estimation_forward.1} parent=1 // loop_pre_header
      _
    $region3: #{motion_estimation_forward.1} parent=1 // loop_header
      %s23 = sphi 0, %s27
      %p24 = scmp.ge.s32.totalorder %s23, 4
      %s33 = sphi 0, %s35
      %s36 = sphi 0, %s33
      %s37 = sphi 0, %s36
      %s53 = sphi 0, %s37
      %s57 = sphi 0, %s57
      %s59 = sphi 0, %s57
      %s60 = sphi 0, %s59
      %s74 = sphi 0, %s60
      %s78 = sphi 0, %s78
      %s80 = sphi 0, %s78
      %s81 = sphi 0, %s80
      %s95 = sphi 0, %s81
      %s99 = sphi 0, %s99
      %s101 = sphi 0, %s99
      %s102 = sphi 0, %s101
      %s116 = sphi 0, %s102
      %s120 = sphi 0, %s120
      %s122 = sphi 0, %s120
      %s123 = sphi 0, %s122
      %s137 = sphi 0, %s123
      %s141 = sphi 0, %s141
      %s143 = sphi 0, %s141
      %s144 = sphi 0, %s143
      %s158 = sphi 0, %s144
      %s162 = sphi 0, %s162
      %s164 = sphi 0, %s162
      %s165 = sphi 0, %s164
      %s179 = sphi 0, %s165
      %s183 = sphi 0, %s183
      %s185 = sphi 0, %s183
      %s186 = sphi 0, %s185
      %s200 = sphi 0, %s186
      %s206 = sphi 0, %s208
      %s209 = sphi 0, %s206
      %s210 = sphi 0, %s209
      %s226 = sphi 0, %s210
      %s232 = sphi 0, %s234
      %s235 = sphi 0, %s232
      %s236 = sphi 0, %s235
      %s252 = sphi 0, %s236
      %s258 = sphi 0, %s260
      %s261 = sphi 0, %s258
      %s262 = sphi 0, %s261
      %s278 = sphi 0, %s262
    $region4: #{motion_estimation_forward.1} parent=1 // loop_header_branch
      %26 = sbr.rel (%p24) target = $region8
    $region5: #{motion_estimation_forward.1} parent=1 // loop_body
      %s28 = ssub.s32 %s23, 1
      %s29 = ssub.s32 %s23, 2
      %s30 = sadd.s32 %s23, 1
      %s31 = ssub.s32 %s23, %s30
      %p32 = scmp.eq.s32.totalorder %s31, 0
      %s34 = sadd.s32 %s33, 1
      %s35 = scalar_select %p32, %s33, %s34
      %p38 = pneg %p32
      %p39 = scmp.eq.s32.totalorder %s23, 1
      %p40 = por %p38, %p39
      %p41 = scmp.ne.s32.totalorder %s33, %s36
      %p42 = scmp.eq.s32.totalorder %s23, 0
      %p43 = por %p41, %p42
      %p44 = scmp.ne.s32.totalorder %s33, %s36
      %p45 = scmp.eq.s32.totalorder %s28, 1
      %p46 = por %p44, %p45
      %p47 = scmp.ne.s32.totalorder %s36, %s37
      %p48 = scmp.eq.s32.totalorder %s28, 0
      %p49 = por %p47, %p48
      %p50 = scmp.ne.s32.totalorder %s36, %s37
      %p51 = scmp.eq.s32.totalorder %s29, 1
      %p52 = por %p50, %p51
      %p54 = scmp.ne.s32.totalorder %s37, %s53
      %p55 = scmp.eq.s32.totalorder %s29, 0
      %p56 = por %p54, %p55
      %s58 = sadd.s32 %s57, 1
      %p61 = scmp.eq.s32.totalorder %s23, 1
      %p62 = scmp.ne.s32.totalorder %s57, %s59
      %p63 = scmp.eq.s32.totalorder %s23, 0
      %p64 = por %p62, %p63
      %p65 = scmp.ne.s32.totalorder %s57, %s59
      %p66 = scmp.eq.s32.totalorder %s28, 1
      %p67 = por %p65, %p66
      %p68 = scmp.ne.s32.totalorder %s59, %s60
      %p69 = scmp.eq.s32.totalorder %s28, 0
      %p70 = por %p68, %p69
      %p71 = scmp.ne.s32.totalorder %s59, %s60
      %p72 = scmp.eq.s32.totalorder %s29, 1
      %p73 = por %p71, %p72
      %p75 = scmp.ne.s32.totalorder %s60, %s74
      %p76 = scmp.eq.s32.totalorder %s29, 0
      %p77 = por %p75, %p76
      %s79 = sadd.s32 %s78, 1
      %p82 = scmp.eq.s32.totalorder %s23, 1
      %p83 = scmp.ne.s32.totalorder %s78, %s80
      %p84 = scmp.eq.s32.totalorder %s23, 0
      %p85 = por %p83, %p84
      %p86 = scmp.ne.s32.totalorder %s78, %s80
      %p87 = scmp.eq.s32.totalorder %s28, 1
      %p88 = por %p86, %p87
      %p89 = scmp.ne.s32.totalorder %s80, %s81
      %p90 = scmp.eq.s32.totalorder %s28, 0
      %p91 = por %p89, %p90
      %p92 = scmp.ne.s32.totalorder %s80, %s81
      %p93 = scmp.eq.s32.totalorder %s29, 1
      %p94 = por %p92, %p93
      %p96 = scmp.ne.s32.totalorder %s81, %s95
      %p97 = scmp.eq.s32.totalorder %s29, 0
      %p98 = por %p96, %p97
      %s100 = sadd.s32 %s99, 1
      %p103 = scmp.eq.s32.totalorder %s23, 1
      %p104 = scmp.ne.s32.totalorder %s99, %s101
      %p105 = scmp.eq.s32.totalorder %s23, 0
      %p106 = por %p104, %p105
      %p107 = scmp.ne.s32.totalorder %s99, %s101
      %p108 = scmp.eq.s32.totalorder %s28, 1
      %p109 = por %p107, %p108
      %p110 = scmp.ne.s32.totalorder %s101, %s102
      %p111 = scmp.eq.s32.totalorder %s28, 0
      %p112 = por %p110, %p111
      %p113 = scmp.ne.s32.totalorder %s101, %s102
      %p114 = scmp.eq.s32.totalorder %s29, 1
      %p115 = por %p113, %p114
      %p117 = scmp.ne.s32.totalorder %s102, %s116
      %p118 = scmp.eq.s32.totalorder %s29, 0
      %p119 = por %p117, %p118
      %s121 = sadd.s32 %s120, 1
      %p124 = scmp.eq.s32.totalorder %s23, 1
      %p125 = scmp.ne.s32.totalorder %s120, %s122
      %p126 = scmp.eq.s32.totalorder %s23, 0
      %p127 = por %p125, %p126
      %p128 = scmp.ne.s32.totalorder %s120, %s122
      %p129 = scmp.eq.s32.totalorder %s28, 1
      %p130 = por %p128, %p129
      %p131 = scmp.ne.s32.totalorder %s122, %s123
      %p132 = scmp.eq.s32.totalorder %s28, 0
      %p133 = por %p131, %p132
      %p134 = scmp.ne.s32.totalorder %s122, %s123
      %p135 = scmp.eq.s32.totalorder %s29, 1
      %p136 = por %p134, %p135
      %p138 = scmp.ne.s32.totalorder %s123, %s137
      %p139 = scmp.eq.s32.totalorder %s29, 0
      %p140 = por %p138, %p139
      %s142 = sadd.s32 %s141, 1
      %p145 = scmp.eq.s32.totalorder %s23, 1
      %p146 = scmp.ne.s32.totalorder %s141, %s143
      %p147 = scmp.eq.s32.totalorder %s23, 0
      %p148 = por %p146, %p147
      %p149 = scmp.ne.s32.totalorder %s141, %s143
      %p150 = scmp.eq.s32.totalorder %s28, 1
      %p151 = por %p149, %p150
      %p152 = scmp.ne.s32.totalorder %s143, %s144
      %p153 = scmp.eq.s32.totalorder %s28, 0
      %p154 = por %p152, %p153
      %p155 = scmp.ne.s32.totalorder %s143, %s144
      %p156 = scmp.eq.s32.totalorder %s29, 1
      %p157 = por %p155, %p156
      %p159 = scmp.ne.s32.totalorder %s144, %s158
      %p160 = scmp.eq.s32.totalorder %s29, 0
      %p161 = por %p159, %p160
      %s163 = sadd.s32 %s162, 1
      %p166 = scmp.eq.s32.totalorder %s23, 1
      %p167 = scmp.ne.s32.totalorder %s162, %s164
      %p168 = scmp.eq.s32.totalorder %s23, 0
      %p169 = por %p167, %p168
      %p170 = scmp.ne.s32.totalorder %s162, %s164
      %p171 = scmp.eq.s32.totalorder %s28, 1
      %p172 = por %p170, %p171
      %p173 = scmp.ne.s32.totalorder %s164, %s165
      %p174 = scmp.eq.s32.totalorder %s28, 0
      %p175 = por %p173, %p174
      %p176 = scmp.ne.s32.totalorder %s164, %s165
      %p177 = scmp.eq.s32.totalorder %s29, 1
      %p178 = por %p176, %p177
      %p180 = scmp.ne.s32.totalorder %s165, %s179
      %p181 = scmp.eq.s32.totalorder %s29, 0
      %p182 = por %p180, %p181
      %s184 = sadd.s32 %s183, 1
      %p187 = scmp.eq.s32.totalorder %s23, 1
      %p188 = scmp.ne.s32.totalorder %s183, %s185
      %p189 = scmp.eq.s32.totalorder %s23, 0
      %p190 = por %p188, %p189
      %p191 = scmp.ne.s32.totalorder %s183, %s185
      %p192 = scmp.eq.s32.totalorder %s28, 1
      %p193 = por %p191, %p192
      %p194 = scmp.ne.s32.totalorder %s185, %s186
      %p195 = scmp.eq.s32.totalorder %s28, 0
      %p196 = por %p194, %p195
      %p197 = scmp.ne.s32.totalorder %s185, %s186
      %p198 = scmp.eq.s32.totalorder %s29, 1
      %p199 = por %p197, %p198
      %p201 = scmp.ne.s32.totalorder %s186, %s200
      %p202 = scmp.eq.s32.totalorder %s29, 0
      %p203 = por %p201, %p202
      %s204 = ssub.s32 %s23, %s30
      %p205 = scmp.eq.s32.totalorder %s204, 0
      %s207 = sadd.s32 %s206, 1
      %s208 = scalar_select %p205, %s206, %s207
      %p211 = pneg %p205
      %p212 = scmp.eq.s32.totalorder %s23, 1
      %p213 = por %p211, %p212
      %p214 = scmp.ne.s32.totalorder %s206, %s209
      %p215 = scmp.eq.s32.totalorder %s23, 0
      %p216 = por %p214, %p215
      %p217 = scmp.ne.s32.totalorder %s206, %s209
      %p218 = scmp.eq.s32.totalorder %s28, 1
      %p219 = por %p217, %p218
      %p220 = scmp.ne.s32.totalorder %s209, %s210
      %p221 = scmp.eq.s32.totalorder %s28, 0
      %p222 = por %p220, %p221
      %p223 = scmp.ne.s32.totalorder %s209, %s210
      %p224 = scmp.eq.s32.totalorder %s29, 1
      %p225 = por %p223, %p224
      %p227 = scmp.ne.s32.totalorder %s210, %s226
      %p228 = scmp.eq.s32.totalorder %s29, 0
      %p229 = por %p227, %p228
      %s230 = ssub.s32 %s23, %s30
      %p231 = scmp.eq.s32.totalorder %s230, 0
      %s233 = sadd.s32 %s232, 1
      %s234 = scalar_select %p231, %s232, %s233
      %p237 = pneg %p231
      %p238 = scmp.eq.s32.totalorder %s23, 1
      %p239 = por %p237, %p238
      %p240 = scmp.ne.s32.totalorder %s232, %s235
      %p241 = scmp.eq.s32.totalorder %s23, 0
      %p242 = por %p240, %p241
      %p243 = scmp.ne.s32.totalorder %s232, %s235
      %p244 = scmp.eq.s32.totalorder %s28, 1
      %p245 = por %p243, %p244
      %p246 = scmp.ne.s32.totalorder %s235, %s236
      %p247 = scmp.eq.s32.totalorder %s28, 0
      %p248 = por %p246, %p247
      %p249 = scmp.ne.s32.totalorder %s235, %s236
      %p250 = scmp.eq.s32.totalorder %s29, 1
      %p251 = por %p249, %p250
      %p253 = scmp.ne.s32.totalorder %s236, %s252
      %p254 = scmp.eq.s32.totalorder %s29, 0
      %p255 = por %p253, %p254
      %s256 = ssub.s32 %s23, %s30
      %p257 = scmp.eq.s32.totalorder %s256, 0
      %s259 = sadd.s32 %s258, 1
      %s260 = scalar_select %p257, %s258, %s259
      %p263 = pneg %p257
      %p264 = scmp.eq.s32.totalorder %s23, 1
      %p265 = por %p263, %p264
      %p266 = scmp.ne.s32.totalorder %s258, %s261
      %p267 = scmp.eq.s32.totalorder %s23, 0
      %p268 = por %p266, %p267
      %p269 = scmp.ne.s32.totalorder %s258, %s261
      %p270 = scmp.eq.s32.totalorder %s28, 1
      %p271 = por %p269, %p270
      %p272 = scmp.ne.s32.totalorder %s261, %s262
      %p273 = scmp.eq.s32.totalorder %s28, 0
      %p274 = por %p272, %p273
      %p275 = scmp.ne.s32.totalorder %s261, %s262
      %p276 = scmp.eq.s32.totalorder %s29, 1
      %p277 = por %p275, %p276
      %p279 = scmp.ne.s32.totalorder %s262, %s278
      %p280 = scmp.eq.s32.totalorder %s29, 0
      %p281 = por %p279, %p280
      %p282 = scmp.le.s32.totalorder 1, %s23
      %p283 = scmp.lt.s32.totalorder %s23, 3
      %p284 = pnand %p282, %p283
      %p285 = pneg %p284
      // Predicated region
      $region9: #{motion_estimation_forward.1} parent=5 // pred_check
        _
      $region10: #{motion_estimation_forward.1} parent=5 // pred_check_branch
        %287 = sbr.rel (%p284) target = $region12
      $region11: #{motion_estimation_forward.1} parent=5 // pred_region
        %s288 = ssub.s32 %s23, 1
        // Predicated region
        $region13: #{motion_estimation_forward.1} parent=11 // pred_check
          %p289 = pneg %p70
        $region14: #{motion_estimation_forward.1} parent=11 // pred_check_branch
          %291 = sbr.rel (%p289) target = $region16
        $region15: #{motion_estimation_forward.1} parent=11 // pred_region
          _
        $region16: #{motion_estimation_forward.1} parent=11 // pred_fallthru
          _
        // Predicated region
        $region17: #{motion_estimation_forward.1} parent=11 // pred_check
          %p292 = pneg %p91
        $region18: #{motion_estimation_forward.1} parent=11 // pred_check_branch
          %294 = sbr.rel (%p292) target = $region20
        $region19: #{motion_estimation_forward.1} parent=11 // pred_region
          _
        $region20: #{motion_estimation_forward.1} parent=11 // pred_fallthru
          _
        // Predicated region
        $region21: #{motion_estimation_forward.1} parent=11 // pred_check
          %p295 = pneg %p112
        $region22: #{motion_estimation_forward.1} parent=11 // pred_check_branch
          %297 = sbr.rel (%p295) target = $region24
        $region23: #{motion_estimation_forward.1} parent=11 // pred_region
          _
        $region24: #{motion_estimation_forward.1} parent=11 // pred_fallthru
          _
        // Predicated region
        $region25: #{motion_estimation_forward.1} parent=11 // pred_check
          %p298 = pneg %p133
        $region26: #{motion_estimation_forward.1} parent=11 // pred_check_branch
          %300 = sbr.rel (%p298) target = $region28
        $region27: #{motion_estimation_forward.1} parent=11 // pred_region
          _
        $region28: #{motion_estimation_forward.1} parent=11 // pred_fallthru
          _
        // Predicated region
        $region29: #{motion_estimation_forward.1} parent=11 // pred_check
          %p301 = pneg %p154
        $region30: #{motion_estimation_forward.1} parent=11 // pred_check_branch
          %303 = sbr.rel (%p301) target = $region32
        $region31: #{motion_estimation_forward.1} parent=11 // pred_region
          _
        $region32: #{motion_estimation_forward.1} parent=11 // pred_fallthru
          _
        // Predicated region
        $region33: #{motion_estimation_forward.1} parent=11 // pred_check
          %p304 = pneg %p175
        $region34: #{motion_estimation_forward.1} parent=11 // pred_check_branch
          %306 = sbr.rel (%p304) target = $region36
        $region35: #{motion_estimation_forward.1} parent=11 // pred_region
          _
        $region36: #{motion_estimation_forward.1} parent=11 // pred_fallthru
          _
        // Predicated region
        $region37: #{motion_estimation_forward.1} parent=11 // pred_check
          %p307 = pneg %p196
        $region38: #{motion_estimation_forward.1} parent=11 // pred_check_branch
          %309 = sbr.rel (%p307) target = $region40
        $region39: #{motion_estimation_forward.1} parent=11 // pred_region
          _
        $region40: #{motion_estimation_forward.1} parent=11 // pred_fallthru
          _
      $region12: #{motion_estimation_forward.1} parent=5 // pred_fallthru
        _
      %p310 = scmp.lt.s32.totalorder %s23, 2
      // Predicated region
      $region41: #{motion_estimation_forward.1} parent=5 // pred_check
        %p311 = pneg %p310
      $region42: #{motion_estimation_forward.1} parent=5 // pred_check_branch
        %313 = sbr.rel (%p311) target = $region44
      $region43: #{motion_estimation_forward.1} parent=5 // pred_region
        // Predicated region
        $region45: #{motion_estimation_forward.1} parent=43 // pred_check
          %p314 = pneg %p43
        $region46: #{motion_estimation_forward.1} parent=43 // pred_check_branch
          %316 = sbr.rel (%p314) target = $region48
        $region47: #{motion_estimation_forward.1} parent=43 // pred_region
          %p317 = scmp.lt.s32.totalorder %s23, 1
          %s318 = scalar_select %p317, %s23, 1
          %s319 = smul.addr %s318, 4
          %s320 = scalar_lea.vmem %s0, %s319
        $region48: #{motion_estimation_forward.1} parent=43 // pred_fallthru
          _
      $region44: #{motion_estimation_forward.1} parent=5 // pred_fallthru
        _
      %p321 = scmp.le.s32.totalorder 1, %s23
      %p322 = scmp.lt.s32.totalorder %s23, 3
      %p323 = pnand %p321, %p322
      %p324 = pneg %p323
      // Predicated region
      $region49: #{motion_estimation_forward.1} parent=5 // pred_check
        _
      $region50: #{motion_estimation_forward.1} parent=5 // pred_check_branch
        %326 = sbr.rel (%p323) target = $region52
      $region51: #{motion_estimation_forward.1} parent=5 // pred_region
        %s327 = ssub.s32 %s23, 1
        %p328 = scmp.lt.s32.totalorder %s28, 1
        %s329 = scalar_select %p328, %s28, 1
        %s330 = smul.addr %s329, 4
        %s331 = scalar_lea.vmem %s0, %s330
        %p332 = pneg %p49
        %p333 = pneg %p46
        %p334 = pneg %p70
        %p335 = pneg %p67
        %p336 = pneg %p91
        %p337 = pneg %p88
        %p338 = pneg %p112
        %p339 = pneg %p109
        %p340 = pneg %p133
        %p341 = pneg %p130
        %p342 = pneg %p154
        %p343 = pneg %p151
        %p344 = pneg %p175
        %p345 = pneg %p172
        %p346 = pneg %p196
        %p347 = pneg %p193
        %p348 = pneg %p222
        %p349 = pneg %p219
        %s350 = sand.u32 %s209, 1
        %s351 = scalar_lea.sflag [#allocation3], %s350
        %s352 = sand.u32 %s209, 1
        %s353 = smul.addr %s352, 4
        %s354 = scalar_lea.vmem [#allocation2], %s353
        %p355 = pneg %p248
        %p356 = pneg %p245
        %s357 = sand.u32 %s235, 1
        %s358 = scalar_lea.sflag [#allocation5], %s357
        %s359 = sand.u32 %s235, 1
        %s360 = smul.addr %s359, 4
        %s361 = scalar_lea.vmem [#allocation4], %s360
        %p362 = pneg %p274
        %p363 = pneg %p271
        %p364 = scmp.lt.s32.totalorder %s28, 1
        %s365 = scalar_select %p364, %s28, 1
        %s366 = scalar_lea.vmem %s10, %s365
        %p367 = scmp.lt.s32.totalorder %s28, 1
        %s368 = scalar_select %p367, %s28, 1
        %s369 = smul.addr %s368, 4
        %s370 = scalar_lea.vmem %s0, %s369
        %p371 = scmp.lt.s32.totalorder %s28, 1
        %s372 = scalar_select %p371, %s28, 1
        %s373 = scalar_lea.vmem %s10, %s372
        %v375 = vld [vmem:[%s370] sm:$0x7]
        %v376 = vld [vmem:[%s1] sm:$0x7]
        %378 = vset.pattern.permute.xlu0 0
        %379 = vperm.xlu0 %378, %v376
        %v380 = vpop.permute.xlu0 %379
        %v382 = vsub.f32 %v375, %v380
        %v383 = vld [vmem:[%s2] sm:$0x7]
        %385 = vset.pattern.permute.xlu0 0
        %386 = vperm.xlu0 %385, %v383
        %v387 = vpop.permute.xlu0 %386
        %v389 = vrcp.pop %v387
        %v390 = vmul.f32 %v382, %v389
        %vm391 = vcmp.ge.f32.partialorder %v390, 0.0
        %vm392 = vcmp.le.f32.partialorder %v390, 1.0
        %vm393 = vmand %vm391, %vm392
        %v394 = vsel %vm393, 1, 0
        %v395 = vrot.slane %v394, 1
        %vm396 = vcmp.ne.s32.totalorder %v395, 0
        %vm397 = vmand %vm393, %vm396
        %v398 = vrot.slane %v394, 2
        %vm399 = vcmp.ne.s32.totalorder %v398, 0
        %vm400 = vmand %vm397, %vm399
        %v401 = vld [vmem:[%s4] sm:$0xf]
        %v402 = vld [vmem:[%s4 + $0x4] sm:$0xf]
        %v403 = vld [vmem:[%s4 + $0x8] sm:$0xf]
        %v404 = vld [vmem:[%s4 + $0xc] sm:$0xf]
        %v405 = vpack.c.bf16 %v390, %v390
        %v406 = vld [vmem:[%s5] sm:$0xff]
        %v407 = vld [vmem:[%s5 + $0x8] sm:$0xff]
        %v408 = vld [vmem:[%s5 + $0x10] sm:$0xff]
        %v409 = vld [vmem:[%s5 + $0x18] sm:$0xff]
        %411 = vset.pattern.permute.xlu0 0
        %412 = vperm.xlu0 %411, %v406
        %v413 = vpop.permute.xlu0 %412
        %416 = vset.pattern.permute.xlu0 0
        %417 = vperm.xlu0 %416, %v407
        %v418 = vpop.permute.xlu0 %417
        %421 = vset.pattern.permute.xlu0 0
        %422 = vperm.xlu0 %421, %v408
        %v423 = vpop.permute.xlu0 %422
        %426 = vset.pattern.permute.xlu0 0
        %427 = vperm.xlu0 %426, %v409
        %v428 = vpop.permute.xlu0 %427
        %v434 = vunpack.c.l.b16 %v401
        %v435 = vunpack.c.l.b16 %v402
        %v436 = vunpack.c.l.b16 %v403
        %v437 = vunpack.c.l.b16 %v404
        %v438 = vpack.c.b16 %v435, %v434
        %v439 = vpack.c.b16 %v437, %v436
        %vm440 = vcmask 23552
        %v442 = vsel %vm440, %v438, 0
        %v445 = vsel %vm440, %v439, 0
        %vm447 = vcmask 1040384
        %vm448 = vcmask 1041408
        %v449 = vsel %vm447, 4294967295, 65535
        %v450 = vsel %vm448, %v449, 0
        %v452 = vand.u32 %v405, %v450
        %454 = vmatprep.subr.bf16.mxu0 0
        %455 = vmatpush1.bf16.msra.mxu0 0
        %456 = vmatprep.subr.bf16.mxu0 0
        %457 = vmatpush1.bf16.msra.mxu0 0
        %458 = vmatprep.subr.bf16.mxu0 0
        %459 = vmatpush1.bf16.msra.mxu0 0
        %460 = vmatprep.subr.bf16.mxu0 0
        %461 = vmatpush1.bf16.msra.mxu0 0
        %462 = vmatprep.subr.bf16.mxu0 0
        %463 = vmatpush1.bf16.msra.mxu0 0
        %464 = vmatprep.subr.bf16.mxu0 0
        %465 = vmatpush1.bf16.msra.mxu0 0
        %466 = vmatprep.subr.bf16.mxu0 0
        %467 = vmatpush1.bf16.msra.mxu0 0
        %468 = vmatprep.subr.bf16.mxu0 0
        %469 = vmatpush1.bf16.msra.mxu0 %v452
        %470 = vmatprep.subr.bf16.mxu0 0
        %471 = vmatpush2.bf16.msra.mxu0 0
        %472 = vmatprep.subr.bf16.mxu0 0
        %473 = vmatpush2.bf16.msra.mxu0 0
        %474 = vmatprep.subr.bf16.mxu0 0
        %475 = vmatpush2.bf16.msra.mxu0 0
        %476 = vmatprep.subr.bf16.mxu0 0
        %477 = vmatpush2.bf16.msra.mxu0 0
        %478 = vmatprep.subr.bf16.mxu0 0
        %479 = vmatpush2.bf16.msra.mxu0 0
        %480 = vmatprep.subr.bf16.mxu0 0
        %481 = vmatpush2.bf16.msra.mxu0 0
        %482 = vmatprep.subr.bf16.mxu0 0
        %483 = vmatpush2.bf16.msra.mxu0 0
        %484 = vmatprep.subr.bf16.mxu0 0
        %485 = vmatpush2.bf16.msra.mxu0 0
        %486 = vmatprep.mubr.bf16.mxu0 0
        %487 = vmatmul.mubr.bf16.gmra.mxu0 %v442
        %v488 = vpop.f32.mrf.mxu0
        %v489 = vadd.f32 %v413, %v488
        %v490 = vpop.f32.mrf.mxu0
        %v491 = vpop.f32.mrf.mxu0
        %v492 = vadd.f32 %v418, %v491
        %v493 = vpop.f32.mrf.mxu0
        %494 = vmatprep.mubr.bf16.mxu0 0
        %495 = vmatmul.mubr.bf16.gmra.mxu0 %v445
        %v496 = vpop.f32.mrf.mxu0
        %v497 = vadd.f32 %v423, %v496
        %v498 = vpop.f32.mrf.mxu0
        %v499 = vpop.f32.mrf.mxu0
        %v500 = vadd.f32 %v428, %v499
        %v501 = vpop.f32.mrf.mxu0
        %502 = vdwg.mxu0
        %v503 = vmax.f32 %v489, 0.0
        %v504 = vmax.f32 %v492, 0.0
        %v505 = vmax.f32 %v497, 0.0
        %v506 = vmax.f32 %v500, 0.0
        %v507 = vld [vmem:[%s6] sm:$0xf]
        %v508 = vpack.c.bf16 %v504, %v503
        %v509 = vpack.c.bf16 %v506, %v505
        %v510 = vld [vmem:[%s7] sm:$0x7f]
        %512 = vset.pattern.permute.xlu0 0
        %513 = vperm.xlu0 %512, %v510
        %v514 = vpop.permute.xlu0 %513
        %vm516 = vcmask 261120
        %v518 = vsel %vm516, %v507, 0
        %520 = vmatprep.subr.bf16.mxu0 0
        %521 = vmatpush1.bf16.msra.mxu0 0
        %522 = vmatprep.subr.bf16.mxu0 0
        %523 = vmatpush1.bf16.msra.mxu0 0
        %524 = vmatprep.subr.bf16.mxu0 0
        %525 = vmatpush1.bf16.msra.mxu0 0
        %526 = vmatprep.subr.bf16.mxu0 0
        %527 = vmatpush1.bf16.msra.mxu0 0
        %528 = vmatprep.subr.bf16.mxu0 0
        %529 = vmatpush1.bf16.msra.mxu0 0
        %530 = vmatprep.subr.bf16.mxu0 0
        %531 = vmatpush1.bf16.msra.mxu0 0
        %532 = vmatprep.subr.bf16.mxu0 0
        %533 = vmatpush1.bf16.msra.mxu0 %v509
        %534 = vmatprep.subr.bf16.mxu0 0
        %535 = vmatpush1.bf16.msra.mxu0 %v508
        %536 = vmatprep.subr.bf16.mxu0 0
        %537 = vmatpush2.bf16.msra.mxu0 0
        %538 = vmatprep.subr.bf16.mxu0 0
        %539 = vmatpush2.bf16.msra.mxu0 0
        %540 = vmatprep.subr.bf16.mxu0 0
        %541 = vmatpush2.bf16.msra.mxu0 0
        %542 = vmatprep.subr.bf16.mxu0 0
        %543 = vmatpush2.bf16.msra.mxu0 0
        %544 = vmatprep.subr.bf16.mxu0 0
        %545 = vmatpush2.bf16.msra.mxu0 0
        %546 = vmatprep.subr.bf16.mxu0 0
        %547 = vmatpush2.bf16.msra.mxu0 0
        %548 = vmatprep.subr.bf16.mxu0 0
        %549 = vmatpush2.bf16.msra.mxu0 0
        %550 = vmatprep.subr.bf16.mxu0 0
        %551 = vmatpush2.bf16.msra.mxu0 0
        %552 = vmatprep.mubr.bf16.mxu0 0
        %553 = vmatmul.mubr.bf16.gmra.mxu0 %v518
        %v554 = vpop.f32.mrf.mxu0
        %v555 = vadd.f32 %v514, %v554
        %v556 = vpop.f32.mrf.mxu0
        %v557 = vpop.f32.mrf.mxu0
        %v558 = vpop.f32.mrf.mxu0
        %559 = vdwg.mxu0
        %v560 = vld [vmem:[%s3] sm:$0x7f]
        %v561 = vsel %vm400, 1, 0
        %v562 = vlaneseq
        %v563 = vshrl.u32 %v562, 7
        %v564 = vsub.s32 0, %v563
        %v565 = vrot.slane %v561, %v564
        %vm566 = vcmp.eq.s32.totalorder %v565, 1
        %568 = vset.pattern.permute.xlu0 0
        %569 = vperm.xlu0 %568, %v560
        %v570 = vpop.permute.xlu0 %569
        %v572 = vsel %vm566, %v555, %v570
        %573 = vst [vmem:[%s354] sm:$0x7] %v572
        %574 = vst [vmem:[%s361 - $0x3] sm:$0x78] %v572
        %v575 = vcvt.s32.f32 %v561
        %576 = vst [vmem:[%s373] sm:$0x1] %v575
        %s577 = sand.u32 %s209, 1
        %s578 = scalar_lea.sflag [#allocation3], %s577
        %s579 = sand.u32 %s209, 1
        %s580 = smul.addr %s579, 4
        %s581 = scalar_lea.vmem [#allocation2], %s580
        %s582 = sand.u32 %s235, 1
        %s583 = scalar_lea.sflag [#allocation5], %s582
        %s584 = sand.u32 %s235, 1
        %s585 = smul.addr %s584, 4
        %s586 = scalar_lea.vmem [#allocation4], %s585
        %p587 = scmp.lt.s32.totalorder %s28, 1
        %s588 = scalar_select %p587, %s28, 1
        %s589 = scalar_lea.vmem %s10, %s588
        // Predicated region
        $region53: #{motion_estimation_forward.1} parent=51 // pred_check
          %p590 = pneg %p219
        $region54: #{motion_estimation_forward.1} parent=51 // pred_check_branch
          %592 = sbr.rel (%p590) target = $region56
        $region55: #{motion_estimation_forward.1} parent=51 // pred_region
          %s594 = ssub.s32 64, 64
          %595 = vsyncadd %s578, %s594
          %s596 = smul.addr %s28, 64
          %s597 = scalar_lea.hbm %s8, %s596
          %s599 = sshll.u32 %s581, 4
          %s600 = int_to_ptr.vmem [resolvable:$true] %s599
          %602 = dma.vmem_to_hbm [thread:$0]  %s600, 64, %s597, %s578
        $region56: #{motion_estimation_forward.1} parent=51 // pred_fallthru
          _
        // Predicated region
        $region57: #{motion_estimation_forward.1} parent=51 // pred_check
          %p603 = pneg %p245
        $region58: #{motion_estimation_forward.1} parent=51 // pred_check_branch
          %605 = sbr.rel (%p603) target = $region60
        $region59: #{motion_estimation_forward.1} parent=51 // pred_region
          %s607 = ssub.s32 64, 64
          %608 = vsyncadd %s583, %s607
          %s609 = smul.addr %s28, 64
          %s610 = scalar_lea.hbm %s9, %s609
          %s612 = sshll.u32 %s586, 4
          %s613 = int_to_ptr.vmem [resolvable:$true] %s612
          %615 = dma.vmem_to_hbm [thread:$0]  %s613, 64, %s610, %s583
        $region60: #{motion_estimation_forward.1} parent=51 // pred_fallthru
          _
        // Predicated region
        $region61: #{motion_estimation_forward.1} parent=51 // pred_check
          %p616 = pneg %p271
        $region62: #{motion_estimation_forward.1} parent=51 // pred_check_branch
          %618 = sbr.rel (%p616) target = $region64
        $region63: #{motion_estimation_forward.1} parent=51 // pred_region
          _
        $region64: #{motion_estimation_forward.1} parent=51 // pred_fallthru
          _
      $region52: #{motion_estimation_forward.1} parent=5 // pred_fallthru
        _
      %p619 = scmp.le.s32.totalorder 2, %s23
      // Predicated region
      $region65: #{motion_estimation_forward.1} parent=5 // pred_check
        %p620 = pneg %p619
      $region66: #{motion_estimation_forward.1} parent=5 // pred_check_branch
        %622 = sbr.rel (%p620) target = $region68
      $region67: #{motion_estimation_forward.1} parent=5 // pred_region
        %s623 = ssub.s32 %s23, 2
        // Predicated region
        $region69: #{motion_estimation_forward.1} parent=67 // pred_check
          %p624 = pneg %p225
        $region70: #{motion_estimation_forward.1} parent=67 // pred_check_branch
          %626 = sbr.rel (%p624) target = $region72
        $region71: #{motion_estimation_forward.1} parent=67 // pred_region
          %s627 = sand.u32 %s210, 1
          %s628 = scalar_lea.sflag [#allocation3], %s627
          %s629 = sand.u32 %s210, 1
          %s630 = smul.addr %s629, 4
          %s631 = scalar_lea.vmem [#allocation2], %s630
          %632 = dma.done %s628, 64
        $region72: #{motion_estimation_forward.1} parent=67 // pred_fallthru
          _
        // Predicated region
        $region73: #{motion_estimation_forward.1} parent=67 // pred_check
          %p633 = pneg %p251
        $region74: #{motion_estimation_forward.1} parent=67 // pred_check_branch
          %635 = sbr.rel (%p633) target = $region76
        $region75: #{motion_estimation_forward.1} parent=67 // pred_region
          %s636 = sand.u32 %s236, 1
          %s637 = scalar_lea.sflag [#allocation5], %s636
          %s638 = sand.u32 %s236, 1
          %s639 = smul.addr %s638, 4
          %s640 = scalar_lea.vmem [#allocation4], %s639
          %641 = dma.done %s637, 64
        $region76: #{motion_estimation_forward.1} parent=67 // pred_fallthru
          _
        // Predicated region
        $region77: #{motion_estimation_forward.1} parent=67 // pred_check
          %p642 = pneg %p277
        $region78: #{motion_estimation_forward.1} parent=67 // pred_check_branch
          %644 = sbr.rel (%p642) target = $region80
        $region79: #{motion_estimation_forward.1} parent=67 // pred_region
          %p645 = scmp.lt.s32.totalorder %s29, 1
          %s646 = scalar_select %p645, %s29, 1
          %s647 = scalar_lea.vmem %s10, %s646
        $region80: #{motion_estimation_forward.1} parent=67 // pred_fallthru
          _
      $region68: #{motion_estimation_forward.1} parent=5 // pred_fallthru
        _
    $region6: #{motion_estimation_forward.1} parent=1 // loop_footer
      %s27 = sadd.s32 1, %s23
    $region7: #{motion_estimation_forward.1} parent=1 // loop_footer_branch
      %22 = sbr.rel target = $region3
    $region8: #{motion_estimation_forward.1} parent=1 // loop_exit
      _
    %648 = vsyncpa [#allocation3], 1
    %s649 = scalar_lea.sflag [#allocation3], 1
    %650 = vsyncpa %s649, 1
    %651 = vsyncpa [#allocation5], 1
    %s652 = scalar_lea.sflag [#allocation5], 1
    %653 = vsyncpa %s652, 1

</llo_original>
